<compile_context>
chip_gen: v5e
topology: v5e:2x2
jax: 0.10.0
libtpu: 0.0.40
codegen_flags: <defaults>
</compile_context>

<pallas_src>
import numpy as np
import jax
import jax.numpy as jnp
from jax.experimental import pallas as pl
from jax.experimental.pallas import tpu as pltpu

# ----------------------------- model dims (from the module spec) ------------
INPUT_DIM = 768                 # input_dim
DECODER_HIDDEN_DIM = 400        # decoder_hidden_dim
Y_CLASSES = 10
Z_CLASSES = 15
BN_EPS = 1e-5

DH2 = DECODER_HIDDEN_DIM // 2   # 200
DH4 = DECODER_HIDDEN_DIM // 4   # 100

# lane-padded dims (multiples of 128)
DH2_P = 256
DH4_P = 128
Y_PAD = 128
Z_PAD = 128                     # lane-dense output slab, sliced to 15 outside
K_LAST = DH4_P + Y_PAD          # 256 : fused fan-in of the last matmul

BM_MAX = 128                    # batch tile (grid axis, megacore-parallel)


def _gelu_exact(x):
    # nn.GELU() default = exact erf formulation
    return 0.5 * x * (1.0 + jax.lax.erf(x * np.float32(1.0 / np.sqrt(2.0))))


# ----------------------------------------------------------------- kernel ---
def decoder_ytoz_kernel(x_ref, ybar_ref, w1_ref, b1_ref, w2_ref, b2_ref,
                        w3t_ref, b3t_ref, out_ref):
    # layer 1: Linear + (folded BN) + GELU     (Dropout = identity at inference)
    h = _gelu_exact(
        jnp.dot(x_ref[...], w1_ref[...], preferred_element_type=jnp.float32)
        + b1_ref[...])
    # layer 2: Linear + (folded BN) + GELU
    g = _gelu_exact(
        jnp.dot(h, w2_ref[...], preferred_element_type=jnp.float32)
        + b2_ref[...])
    # fused epilogue: [g | ybar_pad] @ [W3_pad ; Wt_pad] + (b3 + bt)
    gy = jnp.concatenate([g, ybar_ref[...]], axis=-1)        # (BM, 256), aligned
    out_ref[...] = (
        jnp.dot(gy, w3t_ref[...], preferred_element_type=jnp.float32)
        + b3t_ref[...])


# -------------------------------------------------------------- parameters --
def _linear_params(key, fan_in, fan_out):
    k1, k2 = jax.random.split(key)
    bound = 1.0 / np.sqrt(fan_in)
    w = jax.random.uniform(k1, (fan_in, fan_out), jnp.float32, -bound, bound)
    b = jax.random.uniform(k2, (fan_out,), jnp.float32, -bound, bound)
    return w, b


def _bn_params(key, n):
    k1, k2, k3, k4 = jax.random.split(key, 4)
    gamma = 1.0 + 0.1 * jax.random.normal(k1, (n,), jnp.float32)
    beta = 0.1 * jax.random.normal(k2, (n,), jnp.float32)
    r_mean = 0.1 * jax.random.normal(k3, (n,), jnp.float32)
    r_var = jax.random.uniform(k4, (n,), jnp.float32, 0.5, 1.5)
    return gamma, beta, r_mean, r_var


def make_raw_params(key):
    """Parameters in the same form as the PyTorch module (un-folded, un-padded)."""
    keys = jax.random.split(key, 6)
    p = {}
    p["w1"], p["b1"] = _linear_params(keys[0], INPUT_DIM, DH2)
    p["bn1"] = _bn_params(keys[1], DH2)
    p["w2"], p["b2"] = _linear_params(keys[2], DH2, DH4)
    p["bn2"] = _bn_params(keys[3], DH4)
    p["w3"], p["b3"] = _linear_params(keys[4], DH4, Z_CLASSES)
    p["wt"], p["bt"] = _linear_params(keys[5], Y_CLASSES, Z_CLASSES)
    return p


def _fold_bn(w, b, bn):
    gamma, beta, mean, var = bn
    s = gamma / jnp.sqrt(var + BN_EPS)
    return w * s[None, :], b * s + (beta - mean * s)


def _pad_to(a, shape):
    return jnp.pad(a, [(0, t - s) for s, t in zip(a.shape, shape)])


def pack_params(raw):
    """Fold BN into Linear weights, zero-pad to lane-dense shapes, fuse epilogue."""
    w1f, b1f = _fold_bn(raw["w1"], raw["b1"], raw["bn1"])
    w2f, b2f = _fold_bn(raw["w2"], raw["b2"], raw["bn2"])

    w1p = _pad_to(w1f, (INPUT_DIM, DH2_P))                  # (768, 256)
    b1p = _pad_to(b1f, (DH2_P,)).reshape(1, DH2_P)          # (1, 256)
    w2p = _pad_to(w2f, (DH2_P, DH4_P))                      # (256, 128)
    b2p = _pad_to(b2f, (DH4_P,)).reshape(1, DH4_P)          # (1, 128)

    w3p = _pad_to(raw["w3"], (DH4_P, Z_PAD))                # (128, 128)
    wtp = _pad_to(raw["wt"], (Y_PAD, Z_PAD))                # (128, 128)
    w3t = jnp.concatenate([w3p, wtp], axis=0)               # (256, 128)
    b3p = _pad_to(raw["b3"], (Z_PAD,)).reshape(1, Z_PAD)    # (1, 128)
    btp = _pad_to(raw["bt"], (Z_PAD,)).reshape(1, Z_PAD)    # (1, 128)

    return (w1p, b1p, w2p, b2p, w3t, b3p, btp)


# ----------------------------------------------------------------- wrapper --
def decoder_ytoz_forward(x, ybar, packed):
    """Matches Decoder_YtoZ.forward(encoded, ybar); ybar=None supported."""
    w1p, b1p, w2p, b2p, w3t, b3p, btp = packed
    B = x.shape[0]

    if ybar is None:
        ybar_p = jnp.zeros((B, Y_PAD), jnp.float32)
        b3t = b3p                                            # no transform bias
    else:
        ybar_p = jnp.pad(ybar, ((0, 0), (0, Y_PAD - Y_CLASSES)))
        b3t = b3p + btp

    # batch tiling: 128-row tiles for big batches, single sublane-aligned tile
    # for small ones; pad batch rows (padded rows are sliced off afterwards).
    bm = BM_MAX if B >= BM_MAX else max(8, -(-B // 8) * 8)
    Bp = -(-B // bm) * bm
    if Bp != B:
        x = jnp.pad(x, ((0, Bp - B), (0, 0)))
        ybar_p = jnp.pad(ybar_p, ((0, Bp - B), (0, 0)))

    def _resident(a):   # full-array block, constant index -> stays in VMEM
        return pl.BlockSpec(a.shape, lambda i: (0, 0))

    out = pl.pallas_call(
        decoder_ytoz_kernel,
        out_shape=jax.ShapeDtypeStruct((Bp, Z_PAD), jnp.float32),
        grid_spec=pltpu.PrefetchScalarGridSpec(
            num_scalar_prefetch=0,
            grid=(Bp // bm,),
            in_specs=[
                pl.BlockSpec((bm, INPUT_DIM), lambda i: (i, 0)),
                pl.BlockSpec((bm, Y_PAD), lambda i: (i, 0)),
                _resident(w1p), _resident(b1p),
                _resident(w2p), _resident(b2p),
                _resident(w3t), _resident(b3t),
            ],
            out_specs=pl.BlockSpec((bm, Z_PAD), lambda i: (i, 0)),
        ),
        compiler_params=pltpu.CompilerParams(
            dimension_semantics=("parallel",)),
    )(x, ybar_p, w1p, b1p, w2p, b2p, w3t, b3t)

    # lane-dense slab -> logical output (layout plumbing only)
    return out[:B, :Z_CLASSES]


# ------------------------------------------------------ pure-JAX reference --
def decoder_ytoz_ref(x, ybar, raw):
    def bn(h, params):
        gamma, beta, mean, var = params
        return gamma * (h - mean) / jnp.sqrt(var + BN_EPS) + beta

    h = _gelu_exact(bn(x @ raw["w1"] + raw["b1"], raw["bn1"]))
    # Dropout(0.1) -> identity at inference
    g = _gelu_exact(bn(h @ raw["w2"] + raw["b2"], raw["bn2"]))
    decoded = g @ raw["w3"] + raw["b3"]
    if ybar is None:
        return decoded
    return decoded + ybar @ raw["wt"] + raw["bt"]


if __name__ == "__main__":
    key = jax.random.PRNGKey(0)
    kx, ky, kp = jax.random.split(key, 3)

    B = 16   # small example batch; feature dims fixed by the module spec
    x = jax.random.normal(kx, (B, INPUT_DIM), jnp.float32)
    ybar = jax.random.normal(ky, (B, Y_CLASSES), jnp.float32)

    raw = make_raw_params(kp)
    packed = pack_params(raw)

    # forward(encoded, ybar)
    out = jax.block_until_ready(decoder_ytoz_forward(x, ybar, packed))
    ref = decoder_ytoz_ref(x, ybar, raw)
    assert out.shape == (B, Z_CLASSES)
    np.testing.assert_allclose(np.asarray(out), np.asarray(ref),
                               rtol=1e-4, atol=1e-4)

    # forward(encoded)  (ybar is None path)
    out0 = jax.block_until_ready(decoder_ytoz_forward(x, None, packed))
    ref0 = decoder_ytoz_ref(x, None, raw)
    np.testing.assert_allclose(np.asarray(out0), np.asarray(ref0),
                               rtol=1e-4, atol=1e-4)

    print("KERNEL_OK")
</pallas_src>

<mosaic_0001>
module attributes {stable_mosaic.version = 11 : i64} {
  func.func @decoder_ytoz_kernel(%arg0: i32, %arg1: memref<16x768xf32, #tpu.memory_space<vmem>>, %arg2: memref<16x128xf32, #tpu.memory_space<vmem>>, %arg3: memref<768x256xf32, #tpu.memory_space<vmem>>, %arg4: memref<1x256xf32, #tpu.memory_space<vmem>>, %arg5: memref<256x128xf32, #tpu.memory_space<vmem>>, %arg6: memref<1x128xf32, #tpu.memory_space<vmem>>, %arg7: memref<256x128xf32, #tpu.memory_space<vmem>>, %arg8: memref<1x128xf32, #tpu.memory_space<vmem>>, %arg9: memref<16x128xf32, #tpu.memory_space<vmem>>) attributes {dimension_semantics = [#tpu.dimension_semantics<parallel>], iteration_bounds = array<i64: 1>, scalar_prefetch = 0 : i64, scratch_operands = 0 : i64, tpu.core_type = #tpu.core_type<tc>, window_params = [{transform_indices = @transform_0, window_bounds = array<i64: 16, 768>}, {transform_indices = @transform_1, window_bounds = array<i64: 16, 128>}, {pipeline_mode = #tpu.pipeline_mode<synchronous>, transform_indices = @transform_2, window_bounds = array<i64: 768, 256>}, {pipeline_mode = #tpu.pipeline_mode<synchronous>, transform_indices = @transform_3, window_bounds = array<i64: 1, 256>}, {pipeline_mode = #tpu.pipeline_mode<synchronous>, transform_indices = @transform_4, window_bounds = array<i64: 256, 128>}, {pipeline_mode = #tpu.pipeline_mode<synchronous>, transform_indices = @transform_5, window_bounds = array<i64: 1, 128>}, {pipeline_mode = #tpu.pipeline_mode<synchronous>, transform_indices = @transform_6, window_bounds = array<i64: 256, 128>}, {pipeline_mode = #tpu.pipeline_mode<synchronous>, transform_indices = @transform_7, window_bounds = array<i64: 1, 128>}, {transform_indices = @transform_8, window_bounds = array<i64: 16, 128>}]} {
    %c0 = arith.constant 0 : index
    %c0_0 = arith.constant 0 : index
    %0 = vector.load %arg1[%c0, %c0_0] : memref<16x768xf32, #tpu.memory_space<vmem>>, vector<16x768xf32>
    %c0_1 = arith.constant 0 : index
    %c0_2 = arith.constant 0 : index
    %1 = vector.load %arg3[%c0_1, %c0_2] : memref<768x256xf32, #tpu.memory_space<vmem>>, vector<768x256xf32>
    %cst = arith.constant dense<0.000000e+00> : vector<16x256xf32>
    %2 = tpu.matmul %0, %1, %cst {dimension_numbers = #tpu.dot_dimension_numbers<[1], [0], [0], [1], [0, 0, 1, 1], [], []>} : vector<16x768xf32>, vector<768x256xf32>, vector<16x256xf32> -> vector<16x256xf32>
    %c0_3 = arith.constant 0 : index
    %c0_4 = arith.constant 0 : index
    %3 = vector.load %arg4[%c0_3, %c0_4] : memref<1x256xf32, #tpu.memory_space<vmem>>, vector<1x256xf32>
    %4 = vector.broadcast %3 : vector<1x256xf32> to vector<16x256xf32>
    %5 = arith.addf %2, %4 : vector<16x256xf32>
    %cst_5 = arith.constant 5.000000e-01 : f32
    %6 = vector.broadcast %cst_5 : f32 to vector<16x256xf32>
    %7 = arith.mulf %6, %5 : vector<16x256xf32>
    %cst_6 = arith.constant 0.707106769 : f32
    %8 = vector.broadcast %cst_6 : f32 to vector<16x256xf32>
    %9 = arith.mulf %5, %8 : vector<16x256xf32>
    %10 = math.erf %9 : vector<16x256xf32>
    %cst_7 = arith.constant 1.000000e+00 : f32
    %11 = vector.broadcast %cst_7 : f32 to vector<16x256xf32>
    %12 = arith.addf %11, %10 : vector<16x256xf32>
    %13 = arith.mulf %7, %12 : vector<16x256xf32>
    %c0_8 = arith.constant 0 : index
    %c0_9 = arith.constant 0 : index
    %14 = vector.load %arg5[%c0_8, %c0_9] : memref<256x128xf32, #tpu.memory_space<vmem>>, vector<256x128xf32>
    %cst_10 = arith.constant dense<0.000000e+00> : vector<16x128xf32>
    %15 = tpu.matmul %13, %14, %cst_10 {dimension_numbers = #tpu.dot_dimension_numbers<[1], [0], [0], [1], [0, 0, 1, 1], [], []>} : vector<16x256xf32>, vector<256x128xf32>, vector<16x128xf32> -> vector<16x128xf32>
    %c0_11 = arith.constant 0 : index
    %c0_12 = arith.constant 0 : index
    %16 = vector.load %arg6[%c0_11, %c0_12] : memref<1x128xf32, #tpu.memory_space<vmem>>, vector<1x128xf32>
    %17 = vector.broadcast %16 : vector<1x128xf32> to vector<16x128xf32>
    %18 = arith.addf %15, %17 : vector<16x128xf32>
    %cst_13 = arith.constant 5.000000e-01 : f32
    %19 = vector.broadcast %cst_13 : f32 to vector<16x128xf32>
    %20 = arith.mulf %19, %18 : vector<16x128xf32>
    %cst_14 = arith.constant 0.707106769 : f32
    %21 = vector.broadcast %cst_14 : f32 to vector<16x128xf32>
    %22 = arith.mulf %18, %21 : vector<16x128xf32>
    %23 = math.erf %22 : vector<16x128xf32>
    %cst_15 = arith.constant 1.000000e+00 : f32
    %24 = vector.broadcast %cst_15 : f32 to vector<16x128xf32>
    %25 = arith.addf %24, %23 : vector<16x128xf32>
    %26 = arith.mulf %20, %25 : vector<16x128xf32>
    %c0_16 = arith.constant 0 : index
    %c0_17 = arith.constant 0 : index
    %27 = vector.load %arg2[%c0_16, %c0_17] : memref<16x128xf32, #tpu.memory_space<vmem>>, vector<16x128xf32>
    %28 = tpu.concatenate %26, %27 in 1 : vector<16x128xf32>, vector<16x128xf32> -> vector<16x256xf32>
    %c0_18 = arith.constant 0 : index
    %c0_19 = arith.constant 0 : index
    %29 = vector.load %arg7[%c0_18, %c0_19] : memref<256x128xf32, #tpu.memory_space<vmem>>, vector<256x128xf32>
    %cst_20 = arith.constant dense<0.000000e+00> : vector<16x128xf32>
    %30 = tpu.matmul %28, %29, %cst_20 {dimension_numbers = #tpu.dot_dimension_numbers<[1], [0], [0], [1], [0, 0, 1, 1], [], []>} : vector<16x256xf32>, vector<256x128xf32>, vector<16x128xf32> -> vector<16x128xf32>
    %c0_21 = arith.constant 0 : index
    %c0_22 = arith.constant 0 : index
    %31 = vector.load %arg8[%c0_21, %c0_22] : memref<1x128xf32, #tpu.memory_space<vmem>>, vector<1x128xf32>
    %32 = vector.broadcast %31 : vector<1x128xf32> to vector<16x128xf32>
    %33 = arith.addf %30, %32 : vector<16x128xf32>
    %c0_23 = arith.constant 0 : index
    %c0_24 = arith.constant 0 : index
    %34 = vector.load %arg9[%c0_23, %c0_24] : memref<16x128xf32, #tpu.memory_space<vmem>>, vector<16x128xf32>
    tpu.vector_store %arg9[%c0_23, %c0_24], %33 {strides = array<i32>} : memref<16x128xf32, #tpu.memory_space<vmem>>, vector<16x128xf32>,
    return
  }
  func.func @transform_0(%arg0: i32) -> (i32, i32) {
    %c0_i32 = arith.constant 0 : i32
    %c0_i32_0 = arith.constant 0 : i32
    return %arg0, %c0_i32 : i32, i32
  }
  func.func @transform_1(%arg0: i32) -> (i32, i32) {
    %c0_i32 = arith.constant 0 : i32
    %c0_i32_0 = arith.constant 0 : i32
    return %arg0, %c0_i32 : i32, i32
  }
  func.func @transform_2(%arg0: i32) -> (i32, i32) {
    %c0_i32 = arith.constant 0 : i32
    %c0_i32_0 = arith.constant 0 : i32
    %c0_i32_1 = arith.constant 0 : i32
    return %c0_i32, %c0_i32_0 : i32, i32
  }
  func.func @transform_3(%arg0: i32) -> (i32, i32) {
    %c0_i32 = arith.constant 0 : i32
    %c0_i32_0 = arith.constant 0 : i32
    %c0_i32_1 = arith.constant 0 : i32
    return %c0_i32, %c0_i32_0 : i32, i32
  }
  func.func @transform_4(%arg0: i32) -> (i32, i32) {
    %c0_i32 = arith.constant 0 : i32
    %c0_i32_0 = arith.constant 0 : i32
    %c0_i32_1 = arith.constant 0 : i32
    return %c0_i32, %c0_i32_0 : i32, i32
  }
  func.func @transform_5(%arg0: i32) -> (i32, i32) {
    %c0_i32 = arith.constant 0 : i32
    %c0_i32_0 = arith.constant 0 : i32
    %c0_i32_1 = arith.constant 0 : i32
    return %c0_i32, %c0_i32_0 : i32, i32
  }
  func.func @transform_6(%arg0: i32) -> (i32, i32) {
    %c0_i32 = arith.constant 0 : i32
    %c0_i32_0 = arith.constant 0 : i32
    %c0_i32_1 = arith.constant 0 : i32
    return %c0_i32, %c0_i32_0 : i32, i32
  }
  func.func @transform_7(%arg0: i32) -> (i32, i32) {
    %c0_i32 = arith.constant 0 : i32
    %c0_i32_0 = arith.constant 0 : i32
    %c0_i32_1 = arith.constant 0 : i32
    return %c0_i32, %c0_i32_0 : i32, i32
  }
  func.func @transform_8(%arg0: i32) -> (i32, i32) {
    %c0_i32 = arith.constant 0 : i32
    %c0_i32_0 = arith.constant 0 : i32
    return %arg0, %c0_i32 : i32, i32
  }
}

</mosaic_0001>

<llo_original>
// kernel: tpu_custom_call.1
$region0: #{tpu_custom_call.1}
  #allocation0 [shape = 'u32[]', space=smem, size = 0x4, offset = 0x4, fixed_abs, tag = 'smem constant byte address 0x4 - core index']
  #allocation1 [shape = 'u32[72,128]{1,0:T(1,128)}', space=vmem, size = 0x9000, scoped, tag = 'internal scratch']
  %s0 = inlined_call_operand.hbm [shape: f32[16,768], index: 0, kind: input, shape index: {}]
  %s1 = inlined_call_operand.hbm [shape: f32[16,128], index: 1, kind: input, shape index: {}]
  %s2 = inlined_call_operand.hbm [shape: f32[768,256], index: 2, kind: input, shape index: {}]
  %s3 = inlined_call_operand.vmem [shape: f32[1,256], index: 3, kind: input, shape index: {}]
  %s4 = inlined_call_operand.hbm [shape: f32[256,128], index: 4, kind: input, shape index: {}]
  %s5 = inlined_call_operand.vmem [shape: f32[1,128], index: 5, kind: input, shape index: {}]
  %s6 = inlined_call_operand.hbm [shape: f32[256,128], index: 6, kind: input, shape index: {}]
  %s7 = inlined_call_operand.vmem [shape: f32[1,128], index: 7, kind: input, shape index: {}]
  %s8 = inlined_call_operand.hbm [shape: f32[16,128], index: 8, kind: output, shape index: {}]
  %s9 = sld [smem:[#allocation0]]
  $region62: #{tpu_custom_call.1} parent=0
    _
  %s11 = ssub.s32 1, %s9
  %s12 = scalar_select 0, %s11, %s9
  $region1: #{tpu_custom_call.1} parent=0
    #allocation2 [shape = 'u8[49152]{0}', space=vmem, size = 0xc000, scoped, tag = 'input window, operand 0, single buffered']
    #allocation3 [shape = 's32[1]{0}', space=sflag, size = 0x4, scoped, tag = 'scoped memory for tpu_custom_call.1']
    #allocation4 [shape = 's32[1]{0}', space=sflag, size = 0x4, scoped, tag = 'scoped memory for tpu_custom_call.1']
    #allocation5 [shape = 'u8[8192]{0}', space=vmem, size = 0x2000, scoped, tag = 'input window, operand 1, single buffered']
    #allocation6 [shape = 's32[1]{0}', space=sflag, size = 0x4, scoped, tag = 'scoped memory for tpu_custom_call.1']
    #allocation7 [shape = 'u8[786432]{0}', space=vmem, size = 0xc0000, scoped, tag = 'input window, operand 2, single buffered']
    #allocation8 [shape = 'u8[131072]{0}', space=vmem, size = 0x20000, scoped, tag = 'input window, operand 4, single buffered']
    #allocation9 [shape = 's32[1]{0}', space=sflag, size = 0x4, scoped, tag = 'scoped memory for tpu_custom_call.1']
    #allocation10 [shape = 'u8[131072]{0}', space=vmem, size = 0x20000, scoped, tag = 'input window, operand 6, single buffered']
    #allocation11 [shape = 'u8[8192]{0}', space=vmem, size = 0x2000, scoped, tag = 'output window, operand 0, single buffered']
    %13 = vsyncpa [#allocation3], 0
    %14 = vsyncpa [#allocation6], 0
    %15 = vsyncpa [#allocation9], 0
    %16 = vsyncpa [#allocation4], 0
    // Predicated region
    $region2: #{tpu_custom_call.1} parent=1 // pred_check
      _
    $region3: #{tpu_custom_call.1} parent=1 // pred_check_branch
      %18 = sbr.rel (0) target = $region5
    $region4: #{tpu_custom_call.1} parent=1 // pred_region
      %20 = vsyncadd [#allocation3], 0
      %s21 = sshll.u32 %s0, 4
      %s22 = int_to_ptr.hbm [resolvable:$true] %s21
      %s23 = sshll.u32 [#allocation2], 4
      %s24 = int_to_ptr.vmem [resolvable:$true] %s23
      %29 = dma.hbm_to_vmem [thread:$0]  %s22, 1536, %s24, [#allocation3], 768, 768, 48
    $region5: #{tpu_custom_call.1} parent=1 // pred_fallthru
      _
    // Predicated region
    $region6: #{tpu_custom_call.1} parent=1 // pred_check
      _
    $region7: #{tpu_custom_call.1} parent=1 // pred_check_branch
      %31 = sbr.rel (0) target = $region9
    $region8: #{tpu_custom_call.1} parent=1 // pred_region
      %33 = vsyncadd [#allocation6], 0
      %s34 = sshll.u32 %s1, 4
      %s35 = int_to_ptr.hbm [resolvable:$true] %s34
      %s36 = sshll.u32 [#allocation5], 4
      %s37 = int_to_ptr.vmem [resolvable:$true] %s36
      %42 = dma.hbm_to_vmem [thread:$0]  %s35, 256, %s37, [#allocation6], 128, 128, 8
    $region9: #{tpu_custom_call.1} parent=1 // pred_fallthru
      _
    // Predicated region
    $region10: #{tpu_custom_call.1} parent=1 // pred_check
      _
    $region11: #{tpu_custom_call.1} parent=1 // pred_check_branch
      %44 = sbr.rel (0) target = $region13
    $region12: #{tpu_custom_call.1} parent=1 // pred_region
      %46 = vsyncadd [#allocation6], 0
      %s47 = sshll.u32 %s2, 4
      %s48 = int_to_ptr.hbm [resolvable:$true] %s47
      %s49 = sshll.u32 [#allocation7], 4
      %s50 = int_to_ptr.vmem [resolvable:$true] %s49
      %55 = dma.hbm_to_vmem [thread:$0]  %s48, 24576, %s50, [#allocation6], 256, 256, 16
    $region13: #{tpu_custom_call.1} parent=1 // pred_fallthru
      _
    // Predicated region
    $region14: #{tpu_custom_call.1} parent=1 // pred_check
      _
    $region15: #{tpu_custom_call.1} parent=1 // pred_check_branch
      %57 = sbr.rel (0) target = $region17
    $region16: #{tpu_custom_call.1} parent=1 // pred_region
      _
    $region17: #{tpu_custom_call.1} parent=1 // pred_fallthru
      _
    // Predicated region
    $region18: #{tpu_custom_call.1} parent=1 // pred_check
      _
    $region19: #{tpu_custom_call.1} parent=1 // pred_check_branch
      %59 = sbr.rel (0) target = $region21
    $region20: #{tpu_custom_call.1} parent=1 // pred_region
      %61 = vsyncadd [#allocation9], 0
      %s62 = sshll.u32 %s4, 4
      %s63 = int_to_ptr.hbm [resolvable:$true] %s62
      %s64 = sshll.u32 [#allocation8], 4
      %s65 = int_to_ptr.vmem [resolvable:$true] %s64
      %70 = dma.hbm_to_vmem [thread:$0]  %s63, 4096, %s65, [#allocation9], 128, 128, 8
    $region21: #{tpu_custom_call.1} parent=1 // pred_fallthru
      _
    // Predicated region
    $region22: #{tpu_custom_call.1} parent=1 // pred_check
      _
    $region23: #{tpu_custom_call.1} parent=1 // pred_check_branch
      %72 = sbr.rel (0) target = $region25
    $region24: #{tpu_custom_call.1} parent=1 // pred_region
      _
    $region25: #{tpu_custom_call.1} parent=1 // pred_fallthru
      _
    // Predicated region
    $region26: #{tpu_custom_call.1} parent=1 // pred_check
      _
    $region27: #{tpu_custom_call.1} parent=1 // pred_check_branch
      %74 = sbr.rel (0) target = $region29
    $region28: #{tpu_custom_call.1} parent=1 // pred_region
      %76 = vsyncadd [#allocation9], 0
      %s77 = sshll.u32 %s6, 4
      %s78 = int_to_ptr.hbm [resolvable:$true] %s77
      %s79 = sshll.u32 [#allocation10], 4
      %s80 = int_to_ptr.vmem [resolvable:$true] %s79
      %85 = dma.hbm_to_vmem [thread:$0]  %s78, 4096, %s80, [#allocation9], 128, 128, 8
    $region29: #{tpu_custom_call.1} parent=1 // pred_fallthru
      _
    // Predicated region
    $region30: #{tpu_custom_call.1} parent=1 // pred_check
      _
    $region31: #{tpu_custom_call.1} parent=1 // pred_check_branch
      %87 = sbr.rel (0) target = $region33
    $region32: #{tpu_custom_call.1} parent=1 // pred_region
      _
    $region33: #{tpu_custom_call.1} parent=1 // pred_fallthru
      _
    // Predicated region
    $region34: #{tpu_custom_call.1} parent=1 // pred_check
      _
    $region35: #{tpu_custom_call.1} parent=1 // pred_check_branch
      %89 = sbr.rel (0) target = $region37
    $region36: #{tpu_custom_call.1} parent=1 // pred_region
      %91 = dma.done [#allocation3], 1536
    $region37: #{tpu_custom_call.1} parent=1 // pred_fallthru
      _
    // Predicated region
    $region38: #{tpu_custom_call.1} parent=1 // pred_check
      _
    $region39: #{tpu_custom_call.1} parent=1 // pred_check_branch
      %93 = sbr.rel (0) target = $region41
    $region40: #{tpu_custom_call.1} parent=1 // pred_region
      %95 = dma.done [#allocation6], 256
    $region41: #{tpu_custom_call.1} parent=1 // pred_fallthru
      _
    // Predicated region
    $region42: #{tpu_custom_call.1} parent=1 // pred_check
      _
    $region43: #{tpu_custom_call.1} parent=1 // pred_check_branch
      %97 = sbr.rel (0) target = $region45
    $region44: #{tpu_custom_call.1} parent=1 // pred_region
      %99 = dma.done [#allocation6], 24576
    $region45: #{tpu_custom_call.1} parent=1 // pred_fallthru
      _
    // Predicated region
    $region46: #{tpu_custom_call.1} parent=1 // pred_check
      _
    $region47: #{tpu_custom_call.1} parent=1 // pred_check_branch
      %101 = sbr.rel (0) target = $region49
    $region48: #{tpu_custom_call.1} parent=1 // pred_region
      %103 = dma.done [#allocation9], 4096
    $region49: #{tpu_custom_call.1} parent=1 // pred_fallthru
      _
    // Predicated region
    $region50: #{tpu_custom_call.1} parent=1 // pred_check
      _
    $region51: #{tpu_custom_call.1} parent=1 // pred_check_branch
      %105 = sbr.rel (0) target = $region53
    $region52: #{tpu_custom_call.1} parent=1 // pred_region
      %107 = dma.done [#allocation9], 4096
    $region53: #{tpu_custom_call.1} parent=1 // pred_fallthru
      _
    %v108 = vld [vmem:[#allocation2] sm:$0xff]
    %v109 = vld [vmem:[#allocation2 + $0x8] sm:$0xff]
    %v110 = vld [vmem:[#allocation2 + $0x10] sm:$0xff]
    %v111 = vld [vmem:[#allocation2 + $0x18] sm:$0xff]
    %v112 = vld [vmem:[#allocation2 + $0x20] sm:$0xff]
    %v113 = vld [vmem:[#allocation2 + $0x28] sm:$0xff]
    %v114 = vld [vmem:[#allocation2 + $0x30] sm:$0xff]
    %v115 = vld [vmem:[#allocation2 + $0x38] sm:$0xff]
    %v116 = vld [vmem:[#allocation2 + $0x40] sm:$0xff]
    %v117 = vld [vmem:[#allocation2 + $0x48] sm:$0xff]
    %v118 = vld [vmem:[#allocation2 + $0x50] sm:$0xff]
    %v119 = vld [vmem:[#allocation2 + $0x58] sm:$0xff]
    %v120 = vld [vmem:[#allocation7] sm:$0xff]
    %v121 = vld [vmem:[#allocation7 + $0x8] sm:$0xff]
    %v122 = vld [vmem:[#allocation7 + $0x10] sm:$0xff]
    %v123 = vld [vmem:[#allocation7 + $0x18] sm:$0xff]
    %v124 = vld [vmem:[#allocation7 + $0x20] sm:$0xff]
    %v125 = vld [vmem:[#allocation7 + $0x28] sm:$0xff]
    %v126 = vld [vmem:[#allocation7 + $0x30] sm:$0xff]
    %v127 = vld [vmem:[#allocation7 + $0x38] sm:$0xff]
    %v128 = vld [vmem:[#allocation7 + $0x40] sm:$0xff]
    %v129 = vld [vmem:[#allocation7 + $0x48] sm:$0xff]
    %v130 = vld [vmem:[#allocation7 + $0x50] sm:$0xff]
    %v131 = vld [vmem:[#allocation7 + $0x58] sm:$0xff]
    %v132 = vld [vmem:[#allocation7 + $0x60] sm:$0xff]
    %v133 = vld [vmem:[#allocation7 + $0x68] sm:$0xff]
    %v134 = vld [vmem:[#allocation7 + $0x70] sm:$0xff]
    %v135 = vld [vmem:[#allocation7 + $0x78] sm:$0xff]
    %v136 = vld [vmem:[#allocation7 + $0x80] sm:$0xff]
    %v137 = vld [vmem:[#allocation7 + $0x88] sm:$0xff]
    %v138 = vld [vmem:[#allocation7 + $0x90] sm:$0xff]
    %v139 = vld [vmem:[#allocation7 + $0x98] sm:$0xff]
    %v140 = vld [vmem:[#allocation7 + $0xa0] sm:$0xff]
    %v141 = vld [vmem:[#allocation7 + $0xa8] sm:$0xff]
    %v142 = vld [vmem:[#allocation7 + $0xb0] sm:$0xff]
    %v143 = vld [vmem:[#allocation7 + $0xb8] sm:$0xff]
    %v144 = vld [vmem:[#allocation7 + $0xc0] sm:$0xff]
    %v145 = vld [vmem:[#allocation7 + $0xc8] sm:$0xff]
    %v146 = vld [vmem:[#allocation7 + $0xd0] sm:$0xff]
    %v147 = vld [vmem:[#allocation7 + $0xd8] sm:$0xff]
    %v148 = vld [vmem:[#allocation7 + $0xe0] sm:$0xff]
    %v149 = vld [vmem:[#allocation7 + $0xe8] sm:$0xff]
    %v150 = vld [vmem:[#allocation7 + $0xf0] sm:$0xff]
    %v151 = vld [vmem:[#allocation7 + $0xf8] sm:$0xff]
    %v152 = vld [vmem:[#allocation7 + $0x100] sm:$0xff]
    %v153 = vld [vmem:[#allocation7 + $0x108] sm:$0xff]
    %v154 = vld [vmem:[#allocation7 + $0x110] sm:$0xff]
    %v155 = vld [vmem:[#allocation7 + $0x118] sm:$0xff]
    %v156 = vld [vmem:[#allocation7 + $0x120] sm:$0xff]
    %v157 = vld [vmem:[#allocation7 + $0x128] sm:$0xff]
    %v158 = vld [vmem:[#allocation7 + $0x130] sm:$0xff]
    %v159 = vld [vmem:[#allocation7 + $0x138] sm:$0xff]
    %v160 = vld [vmem:[#allocation7 + $0x140] sm:$0xff]
    %v161 = vld [vmem:[#allocation7 + $0x148] sm:$0xff]
    %v162 = vld [vmem:[#allocation7 + $0x150] sm:$0xff]
    %v163 = vld [vmem:[#allocation7 + $0x158] sm:$0xff]
    %v164 = vld [vmem:[#allocation7 + $0x160] sm:$0xff]
    %v165 = vld [vmem:[#allocation7 + $0x168] sm:$0xff]
    %v166 = vld [vmem:[#allocation7 + $0x170] sm:$0xff]
    %v167 = vld [vmem:[#allocation7 + $0x178] sm:$0xff]
    %v168 = vld [vmem:[#allocation7 + $0x180] sm:$0xff]
    %v169 = vld [vmem:[#allocation7 + $0x188] sm:$0xff]
    %v170 = vld [vmem:[#allocation7 + $0x190] sm:$0xff]
    %v171 = vld [vmem:[#allocation7 + $0x198] sm:$0xff]
    %v172 = vld [vmem:[#allocation7 + $0x1a0] sm:$0xff]
    %v173 = vld [vmem:[#allocation7 + $0x1a8] sm:$0xff]
    %v174 = vld [vmem:[#allocation7 + $0x1b0] sm:$0xff]
    %v175 = vld [vmem:[#allocation7 + $0x1b8] sm:$0xff]
    %v176 = vld [vmem:[#allocation7 + $0x1c0] sm:$0xff]
    %v177 = vld [vmem:[#allocation7 + $0x1c8] sm:$0xff]
    %v178 = vld [vmem:[#allocation7 + $0x1d0] sm:$0xff]
    %v179 = vld [vmem:[#allocation7 + $0x1d8] sm:$0xff]
    %v180 = vld [vmem:[#allocation7 + $0x1e0] sm:$0xff]
    %v181 = vld [vmem:[#allocation7 + $0x1e8] sm:$0xff]
    %v182 = vld [vmem:[#allocation7 + $0x1f0] sm:$0xff]
    %v183 = vld [vmem:[#allocation7 + $0x1f8] sm:$0xff]
    %v184 = vld [vmem:[#allocation7 + $0x200] sm:$0xff]
    %v185 = vld [vmem:[#allocation7 + $0x208] sm:$0xff]
    %v186 = vld [vmem:[#allocation7 + $0x210] sm:$0xff]
    %v187 = vld [vmem:[#allocation7 + $0x218] sm:$0xff]
    %v188 = vld [vmem:[#allocation7 + $0x220] sm:$0xff]
    %v189 = vld [vmem:[#allocation7 + $0x228] sm:$0xff]
    %v190 = vld [vmem:[#allocation7 + $0x230] sm:$0xff]
    %v191 = vld [vmem:[#allocation7 + $0x238] sm:$0xff]
    %v192 = vld [vmem:[#allocation7 + $0x240] sm:$0xff]
    %v193 = vld [vmem:[#allocation7 + $0x248] sm:$0xff]
    %v194 = vld [vmem:[#allocation7 + $0x250] sm:$0xff]
    %v195 = vld [vmem:[#allocation7 + $0x258] sm:$0xff]
    %v196 = vld [vmem:[#allocation7 + $0x260] sm:$0xff]
    %v197 = vld [vmem:[#allocation7 + $0x268] sm:$0xff]
    %v198 = vld [vmem:[#allocation7 + $0x270] sm:$0xff]
    %v199 = vld [vmem:[#allocation7 + $0x278] sm:$0xff]
    %v200 = vld [vmem:[#allocation7 + $0x280] sm:$0xff]
    %v201 = vld [vmem:[#allocation7 + $0x288] sm:$0xff]
    %v202 = vld [vmem:[#allocation7 + $0x290] sm:$0xff]
    %v203 = vld [vmem:[#allocation7 + $0x298] sm:$0xff]
    %v204 = vld [vmem:[#allocation7 + $0x2a0] sm:$0xff]
    %v205 = vld [vmem:[#allocation7 + $0x2a8] sm:$0xff]
    %v206 = vld [vmem:[#allocation7 + $0x2b0] sm:$0xff]
    %v207 = vld [vmem:[#allocation7 + $0x2b8] sm:$0xff]
    %v208 = vld [vmem:[#allocation7 + $0x2c0] sm:$0xff]
    %v209 = vld [vmem:[#allocation7 + $0x2c8] sm:$0xff]
    %v210 = vld [vmem:[#allocation7 + $0x2d0] sm:$0xff]
    %v211 = vld [vmem:[#allocation7 + $0x2d8] sm:$0xff]
    %v212 = vld [vmem:[#allocation7 + $0x2e0] sm:$0xff]
    %v213 = vld [vmem:[#allocation7 + $0x2e8] sm:$0xff]
    %v214 = vld [vmem:[#allocation7 + $0x2f0] sm:$0xff]
    %v215 = vld [vmem:[#allocation7 + $0x2f8] sm:$0xff]
    %v216 = vld [vmem:[#allocation7 + $0x300] sm:$0xff]
    %v217 = vld [vmem:[#allocation7 + $0x308] sm:$0xff]
    %v218 = vld [vmem:[#allocation7 + $0x310] sm:$0xff]
    %v219 = vld [vmem:[#allocation7 + $0x318] sm:$0xff]
    %v220 = vld [vmem:[#allocation7 + $0x320] sm:$0xff]
    %v221 = vld [vmem:[#allocation7 + $0x328] sm:$0xff]
    %v222 = vld [vmem:[#allocation7 + $0x330] sm:$0xff]
    %v223 = vld [vmem:[#allocation7 + $0x338] sm:$0xff]
    %v224 = vld [vmem:[#allocation7 + $0x340] sm:$0xff]
    %v225 = vld [vmem:[#allocation7 + $0x348] sm:$0xff]
    %v226 = vld [vmem:[#allocation7 + $0x350] sm:$0xff]
    %v227 = vld [vmem:[#allocation7 + $0x358] sm:$0xff]
    %v228 = vld [vmem:[#allocation7 + $0x360] sm:$0xff]
    %v229 = vld [vmem:[#allocation7 + $0x368] sm:$0xff]
    %v230 = vld [vmem:[#allocation7 + $0x370] sm:$0xff]
    %v231 = vld [vmem:[#allocation7 + $0x378] sm:$0xff]
    %v232 = vld [vmem:[#allocation7 + $0x380] sm:$0xff]
    %v233 = vld [vmem:[#allocation7 + $0x388] sm:$0xff]
    %v234 = vld [vmem:[#allocation7 + $0x390] sm:$0xff]
    %v235 = vld [vmem:[#allocation7 + $0x398] sm:$0xff]
    %v236 = vld [vmem:[#allocation7 + $0x3a0] sm:$0xff]
    %v237 = vld [vmem:[#allocation7 + $0x3a8] sm:$0xff]
    %v238 = vld [vmem:[#allocation7 + $0x3b0] sm:$0xff]
    %v239 = vld [vmem:[#allocation7 + $0x3b8] sm:$0xff]
    %v240 = vld [vmem:[#allocation7 + $0x3c0] sm:$0xff]
    %v241 = vld [vmem:[#allocation7 + $0x3c8] sm:$0xff]
    %v242 = vld [vmem:[#allocation7 + $0x3d0] sm:$0xff]
    %v243 = vld [vmem:[#allocation7 + $0x3d8] sm:$0xff]
    %v244 = vld [vmem:[#allocation7 + $0x3e0] sm:$0xff]
    %v245 = vld [vmem:[#allocation7 + $0x3e8] sm:$0xff]
    %v246 = vld [vmem:[#allocation7 + $0x3f0] sm:$0xff]
    %v247 = vld [vmem:[#allocation7 + $0x3f8] sm:$0xff]
    %v248 = vld [vmem:[#allocation7 + $0x400] sm:$0xff]
    %v249 = vld [vmem:[#allocation7 + $0x408] sm:$0xff]
    %v250 = vld [vmem:[#allocation7 + $0x410] sm:$0xff]
    %v251 = vld [vmem:[#allocation7 + $0x418] sm:$0xff]
    %v252 = vld [vmem:[#allocation7 + $0x420] sm:$0xff]
    %v253 = vld [vmem:[#allocation7 + $0x428] sm:$0xff]
    %v254 = vld [vmem:[#allocation7 + $0x430] sm:$0xff]
    %v255 = vld [vmem:[#allocation7 + $0x438] sm:$0xff]
    %v256 = vld [vmem:[#allocation7 + $0x440] sm:$0xff]
    %v257 = vld [vmem:[#allocation7 + $0x448] sm:$0xff]
    %v258 = vld [vmem:[#allocation7 + $0x450] sm:$0xff]
    %v259 = vld [vmem:[#allocation7 + $0x458] sm:$0xff]
    %v260 = vld [vmem:[#allocation7 + $0x460] sm:$0xff]
    %v261 = vld [vmem:[#allocation7 + $0x468] sm:$0xff]
    %v262 = vld [vmem:[#allocation7 + $0x470] sm:$0xff]
    %v263 = vld [vmem:[#allocation7 + $0x478] sm:$0xff]
    %v264 = vld [vmem:[#allocation7 + $0x480] sm:$0xff]
    %v265 = vld [vmem:[#allocation7 + $0x488] sm:$0xff]
    %v266 = vld [vmem:[#allocation7 + $0x490] sm:$0xff]
    %v267 = vld [vmem:[#allocation7 + $0x498] sm:$0xff]
    %v268 = vld [vmem:[#allocation7 + $0x4a0] sm:$0xff]
    %v269 = vld [vmem:[#allocation7 + $0x4a8] sm:$0xff]
    %v270 = vld [vmem:[#allocation7 + $0x4b0] sm:$0xff]
    %v271 = vld [vmem:[#allocation7 + $0x4b8] sm:$0xff]
    %v272 = vld [vmem:[#allocation7 + $0x4c0] sm:$0xff]
    %v273 = vld [vmem:[#allocation7 + $0x4c8] sm:$0xff]
    %v274 = vld [vmem:[#allocation7 + $0x4d0] sm:$0xff]
    %v275 = vld [vmem:[#allocation7 + $0x4d8] sm:$0xff]
    %v276 = vld [vmem:[#allocation7 + $0x4e0] sm:$0xff]
    %v277 = vld [vmem:[#allocation7 + $0x4e8] sm:$0xff]
    %v278 = vld [vmem:[#allocation7 + $0x4f0] sm:$0xff]
    %v279 = vld [vmem:[#allocation7 + $0x4f8] sm:$0xff]
    %v280 = vld [vmem:[#allocation7 + $0x500] sm:$0xff]
    %v281 = vld [vmem:[#allocation7 + $0x508] sm:$0xff]
    %v282 = vld [vmem:[#allocation7 + $0x510] sm:$0xff]
    %v283 = vld [vmem:[#allocation7 + $0x518] sm:$0xff]
    %v284 = vld [vmem:[#allocation7 + $0x520] sm:$0xff]
    %v285 = vld [vmem:[#allocation7 + $0x528] sm:$0xff]
    %v286 = vld [vmem:[#allocation7 + $0x530] sm:$0xff]
    %v287 = vld [vmem:[#allocation7 + $0x538] sm:$0xff]
    %v288 = vld [vmem:[#allocation7 + $0x540] sm:$0xff]
    %v289 = vld [vmem:[#allocation7 + $0x548] sm:$0xff]
    %v290 = vld [vmem:[#allocation7 + $0x550] sm:$0xff]
    %v291 = vld [vmem:[#allocation7 + $0x558] sm:$0xff]
    %v292 = vld [vmem:[#allocation7 + $0x560] sm:$0xff]
    %v293 = vld [vmem:[#allocation7 + $0x568] sm:$0xff]
    %v294 = vld [vmem:[#allocation7 + $0x570] sm:$0xff]
    %v295 = vld [vmem:[#allocation7 + $0x578] sm:$0xff]
    %v296 = vld [vmem:[#allocation7 + $0x580] sm:$0xff]
    %v297 = vld [vmem:[#allocation7 + $0x588] sm:$0xff]
    %v298 = vld [vmem:[#allocation7 + $0x590] sm:$0xff]
    %v299 = vld [vmem:[#allocation7 + $0x598] sm:$0xff]
    %v300 = vld [vmem:[#allocation7 + $0x5a0] sm:$0xff]
    %v301 = vld [vmem:[#allocation7 + $0x5a8] sm:$0xff]
    %v302 = vld [vmem:[#allocation7 + $0x5b0] sm:$0xff]
    %v303 = vld [vmem:[#allocation7 + $0x5b8] sm:$0xff]
    %v304 = vld [vmem:[#allocation7 + $0x5c0] sm:$0xff]
    %v305 = vld [vmem:[#allocation7 + $0x5c8] sm:$0xff]
    %v306 = vld [vmem:[#allocation7 + $0x5d0] sm:$0xff]
    %v307 = vld [vmem:[#allocation7 + $0x5d8] sm:$0xff]
    %v308 = vld [vmem:[#allocation7 + $0x5e0] sm:$0xff]
    %v309 = vld [vmem:[#allocation7 + $0x5e8] sm:$0xff]
    %v310 = vld [vmem:[#allocation7 + $0x5f0] sm:$0xff]
    %v311 = vld [vmem:[#allocation7 + $0x5f8] sm:$0xff]
    %v312 = vld [vmem:[%s3] sm:$0x3]
    %v314 = vperm.slane %v312, 0
    %v315 = vperm.slane %v312, 1
    %318 = vmatpush.msra.mxu0 %v150
    %319 = vmatpush.msra.mxu0 %v148
    %320 = vmatpush.msra.mxu0 %v146
    %321 = vmatpush.msra.mxu0 %v144
    %322 = vmatpush.msra.mxu0 %v142
    %323 = vmatpush.msra.mxu0 %v140
    %324 = vmatpush.msra.mxu0 %v138
    %325 = vmatpush.msra.mxu0 %v136
    %326 = vmatpush.msra.mxu0 %v134
    %327 = vmatpush.msra.mxu0 %v132
    %328 = vmatpush.msra.mxu0 %v130
    %329 = vmatpush.msra.mxu0 %v128
    %330 = vmatpush.msra.mxu0 %v126
    %331 = vmatpush.msra.mxu0 %v124
    %332 = vmatpush.msra.mxu0 %v122
    %333 = vmatpush.msra.mxu0 %v120
    %334 = vmatmul.f32.gmra.mxu0 %v108
    %v335 = vpop.f32.mrf.mxu0
    %v336 = vadd.f32 %v314, %v335
    %337 = vmatmul.f32.gmra.mxu0 %v114
    %v338 = vpop.f32.mrf.mxu0
    %v339 = vadd.f32 %v314, %v338
    %340 = vdwg.mxu0
    %341 = vmatpush.msra.mxu0 %v182
    %342 = vmatpush.msra.mxu0 %v180
    %343 = vmatpush.msra.mxu0 %v178
    %344 = vmatpush.msra.mxu0 %v176
    %345 = vmatpush.msra.mxu0 %v174
    %346 = vmatpush.msra.mxu0 %v172
    %347 = vmatpush.msra.mxu0 %v170
    %348 = vmatpush.msra.mxu0 %v168
    %349 = vmatpush.msra.mxu0 %v166
    %350 = vmatpush.msra.mxu0 %v164
    %351 = vmatpush.msra.mxu0 %v162
    %352 = vmatpush.msra.mxu0 %v160
    %353 = vmatpush.msra.mxu0 %v158
    %354 = vmatpush.msra.mxu0 %v156
    %355 = vmatpush.msra.mxu0 %v154
    %356 = vmatpush.msra.mxu0 %v152
    %357 = vmatmul.f32.gmra.mxu0 %v109
    %v358 = vpop.f32.mrf.mxu0
    %v359 = vadd.f32 %v336, %v358
    %360 = vmatmul.f32.gmra.mxu0 %v115
    %v361 = vpop.f32.mrf.mxu0
    %v362 = vadd.f32 %v339, %v361
    %363 = vdwg.mxu0
    %364 = vmatpush.msra.mxu0 %v214
    %365 = vmatpush.msra.mxu0 %v212
    %366 = vmatpush.msra.mxu0 %v210
    %367 = vmatpush.msra.mxu0 %v208
    %368 = vmatpush.msra.mxu0 %v206
    %369 = vmatpush.msra.mxu0 %v204
    %370 = vmatpush.msra.mxu0 %v202
    %371 = vmatpush.msra.mxu0 %v200
    %372 = vmatpush.msra.mxu0 %v198
    %373 = vmatpush.msra.mxu0 %v196
    %374 = vmatpush.msra.mxu0 %v194
    %375 = vmatpush.msra.mxu0 %v192
    %376 = vmatpush.msra.mxu0 %v190
    %377 = vmatpush.msra.mxu0 %v188
    %378 = vmatpush.msra.mxu0 %v186
    %379 = vmatpush.msra.mxu0 %v184
    %380 = vmatmul.f32.gmra.mxu0 %v110
    %v381 = vpop.f32.mrf.mxu0
    %v382 = vadd.f32 %v359, %v381
    %383 = vmatmul.f32.gmra.mxu0 %v116
    %v384 = vpop.f32.mrf.mxu0
    %v385 = vadd.f32 %v362, %v384
    %386 = vdwg.mxu0
    %387 = vmatpush.msra.mxu0 %v246
    %388 = vmatpush.msra.mxu0 %v244
    %389 = vmatpush.msra.mxu0 %v242
    %390 = vmatpush.msra.mxu0 %v240
    %391 = vmatpush.msra.mxu0 %v238
    %392 = vmatpush.msra.mxu0 %v236
    %393 = vmatpush.msra.mxu0 %v234
    %394 = vmatpush.msra.mxu0 %v232
    %395 = vmatpush.msra.mxu0 %v230
    %396 = vmatpush.msra.mxu0 %v228
    %397 = vmatpush.msra.mxu0 %v226
    %398 = vmatpush.msra.mxu0 %v224
    %399 = vmatpush.msra.mxu0 %v222
    %400 = vmatpush.msra.mxu0 %v220
    %401 = vmatpush.msra.mxu0 %v218
    %402 = vmatpush.msra.mxu0 %v216
    %403 = vmatmul.f32.gmra.mxu0 %v111
    %v404 = vpop.f32.mrf.mxu0
    %v405 = vadd.f32 %v382, %v404
    %406 = vmatmul.f32.gmra.mxu0 %v117
    %v407 = vpop.f32.mrf.mxu0
    %v408 = vadd.f32 %v385, %v407
    %409 = vdwg.mxu0
    %410 = vmatpush.msra.mxu0 %v278
    %411 = vmatpush.msra.mxu0 %v276
    %412 = vmatpush.msra.mxu0 %v274
    %413 = vmatpush.msra.mxu0 %v272
    %414 = vmatpush.msra.mxu0 %v270
    %415 = vmatpush.msra.mxu0 %v268
    %416 = vmatpush.msra.mxu0 %v266
    %417 = vmatpush.msra.mxu0 %v264
    %418 = vmatpush.msra.mxu0 %v262
    %419 = vmatpush.msra.mxu0 %v260
    %420 = vmatpush.msra.mxu0 %v258
    %421 = vmatpush.msra.mxu0 %v256
    %422 = vmatpush.msra.mxu0 %v254
    %423 = vmatpush.msra.mxu0 %v252
    %424 = vmatpush.msra.mxu0 %v250
    %425 = vmatpush.msra.mxu0 %v248
    %426 = vmatmul.f32.gmra.mxu0 %v112
    %v427 = vpop.f32.mrf.mxu0
    %v428 = vadd.f32 %v405, %v427
    %429 = vmatmul.f32.gmra.mxu0 %v118
    %v430 = vpop.f32.mrf.mxu0
    %v431 = vadd.f32 %v408, %v430
    %432 = vdwg.mxu0
    %433 = vmatpush.msra.mxu0 %v310
    %434 = vmatpush.msra.mxu0 %v308
    %435 = vmatpush.msra.mxu0 %v306
    %436 = vmatpush.msra.mxu0 %v304
    %437 = vmatpush.msra.mxu0 %v302
    %438 = vmatpush.msra.mxu0 %v300
    %439 = vmatpush.msra.mxu0 %v298
    %440 = vmatpush.msra.mxu0 %v296
    %441 = vmatpush.msra.mxu0 %v294
    %442 = vmatpush.msra.mxu0 %v292
    %443 = vmatpush.msra.mxu0 %v290
    %444 = vmatpush.msra.mxu0 %v288
    %445 = vmatpush.msra.mxu0 %v286
    %446 = vmatpush.msra.mxu0 %v284
    %447 = vmatpush.msra.mxu0 %v282
    %448 = vmatpush.msra.mxu0 %v280
    %449 = vmatmul.f32.gmra.mxu0 %v113
    %v450 = vpop.f32.mrf.mxu0
    %v451 = vadd.f32 %v428, %v450
    %452 = vmatmul.f32.gmra.mxu0 %v119
    %v453 = vpop.f32.mrf.mxu0
    %v454 = vadd.f32 %v431, %v453
    %455 = vdwg.mxu0
    %456 = vmatpush.msra.mxu0 %v151
    %457 = vmatpush.msra.mxu0 %v149
    %458 = vmatpush.msra.mxu0 %v147
    %459 = vmatpush.msra.mxu0 %v145
    %460 = vmatpush.msra.mxu0 %v143
    %461 = vmatpush.msra.mxu0 %v141
    %462 = vmatpush.msra.mxu0 %v139
    %463 = vmatpush.msra.mxu0 %v137
    %464 = vmatpush.msra.mxu0 %v135
    %465 = vmatpush.msra.mxu0 %v133
    %466 = vmatpush.msra.mxu0 %v131
    %467 = vmatpush.msra.mxu0 %v129
    %468 = vmatpush.msra.mxu0 %v127
    %469 = vmatpush.msra.mxu0 %v125
    %470 = vmatpush.msra.mxu0 %v123
    %471 = vmatpush.msra.mxu0 %v121
    %472 = vmatmul.f32.gmra.mxu0 %v108
    %v473 = vpop.f32.mrf.mxu0
    %v474 = vadd.f32 %v315, %v473
    %475 = vmatmul.f32.gmra.mxu0 %v114
    %v476 = vpop.f32.mrf.mxu0
    %v477 = vadd.f32 %v315, %v476
    %478 = vdwg.mxu0
    %479 = vmatpush.msra.mxu0 %v183
    %480 = vmatpush.msra.mxu0 %v181
    %481 = vmatpush.msra.mxu0 %v179
    %482 = vmatpush.msra.mxu0 %v177
    %483 = vmatpush.msra.mxu0 %v175
    %484 = vmatpush.msra.mxu0 %v173
    %485 = vmatpush.msra.mxu0 %v171
    %486 = vmatpush.msra.mxu0 %v169
    %487 = vmatpush.msra.mxu0 %v167
    %488 = vmatpush.msra.mxu0 %v165
    %489 = vmatpush.msra.mxu0 %v163
    %490 = vmatpush.msra.mxu0 %v161
    %491 = vmatpush.msra.mxu0 %v159
    %492 = vmatpush.msra.mxu0 %v157
    %493 = vmatpush.msra.mxu0 %v155
    %494 = vmatpush.msra.mxu0 %v153
    %495 = vmatmul.f32.gmra.mxu0 %v109
    %v496 = vpop.f32.mrf.mxu0
    %v497 = vadd.f32 %v474, %v496
    %498 = vmatmul.f32.gmra.mxu0 %v115
    %v499 = vpop.f32.mrf.mxu0
    %v500 = vadd.f32 %v477, %v499
    %501 = vdwg.mxu0
    %502 = vmatpush.msra.mxu0 %v215
    %503 = vmatpush.msra.mxu0 %v213
    %504 = vmatpush.msra.mxu0 %v211
    %505 = vmatpush.msra.mxu0 %v209
    %506 = vmatpush.msra.mxu0 %v207
    %507 = vmatpush.msra.mxu0 %v205
    %508 = vmatpush.msra.mxu0 %v203
    %509 = vmatpush.msra.mxu0 %v201
    %510 = vmatpush.msra.mxu0 %v199
    %511 = vmatpush.msra.mxu0 %v197
    %512 = vmatpush.msra.mxu0 %v195
    %513 = vmatpush.msra.mxu0 %v193
    %514 = vmatpush.msra.mxu0 %v191
    %515 = vmatpush.msra.mxu0 %v189
    %516 = vmatpush.msra.mxu0 %v187
    %517 = vmatpush.msra.mxu0 %v185
    %518 = vmatmul.f32.gmra.mxu0 %v110
    %v519 = vpop.f32.mrf.mxu0
    %v520 = vadd.f32 %v497, %v519
    %521 = vmatmul.f32.gmra.mxu0 %v116
    %v522 = vpop.f32.mrf.mxu0
    %v523 = vadd.f32 %v500, %v522
    %524 = vdwg.mxu0
    %525 = vmatpush.msra.mxu0 %v247
    %526 = vmatpush.msra.mxu0 %v245
    %527 = vmatpush.msra.mxu0 %v243
    %528 = vmatpush.msra.mxu0 %v241
    %529 = vmatpush.msra.mxu0 %v239
    %530 = vmatpush.msra.mxu0 %v237
    %531 = vmatpush.msra.mxu0 %v235
    %532 = vmatpush.msra.mxu0 %v233
    %533 = vmatpush.msra.mxu0 %v231
    %534 = vmatpush.msra.mxu0 %v229
    %535 = vmatpush.msra.mxu0 %v227
    %536 = vmatpush.msra.mxu0 %v225
    %537 = vmatpush.msra.mxu0 %v223
    %538 = vmatpush.msra.mxu0 %v221
    %539 = vmatpush.msra.mxu0 %v219
    %540 = vmatpush.msra.mxu0 %v217
    %541 = vmatmul.f32.gmra.mxu0 %v111
    %v542 = vpop.f32.mrf.mxu0
    %v543 = vadd.f32 %v520, %v542
    %544 = vmatmul.f32.gmra.mxu0 %v117
    %v545 = vpop.f32.mrf.mxu0
    %v546 = vadd.f32 %v523, %v545
    %547 = vdwg.mxu0
    %548 = vmatpush.msra.mxu0 %v279
    %549 = vmatpush.msra.mxu0 %v277
    %550 = vmatpush.msra.mxu0 %v275
    %551 = vmatpush.msra.mxu0 %v273
    %552 = vmatpush.msra.mxu0 %v271
    %553 = vmatpush.msra.mxu0 %v269
    %554 = vmatpush.msra.mxu0 %v267
    %555 = vmatpush.msra.mxu0 %v265
    %556 = vmatpush.msra.mxu0 %v263
    %557 = vmatpush.msra.mxu0 %v261
    %558 = vmatpush.msra.mxu0 %v259
    %559 = vmatpush.msra.mxu0 %v257
    %560 = vmatpush.msra.mxu0 %v255
    %561 = vmatpush.msra.mxu0 %v253
    %562 = vmatpush.msra.mxu0 %v251
    %563 = vmatpush.msra.mxu0 %v249
    %564 = vmatmul.f32.gmra.mxu0 %v112
    %v565 = vpop.f32.mrf.mxu0
    %v566 = vadd.f32 %v543, %v565
    %567 = vmatmul.f32.gmra.mxu0 %v118
    %v568 = vpop.f32.mrf.mxu0
    %v569 = vadd.f32 %v546, %v568
    %570 = vdwg.mxu0
    %571 = vmatpush.msra.mxu0 %v311
    %572 = vmatpush.msra.mxu0 %v309
    %573 = vmatpush.msra.mxu0 %v307
    %574 = vmatpush.msra.mxu0 %v305
    %575 = vmatpush.msra.mxu0 %v303
    %576 = vmatpush.msra.mxu0 %v301
    %577 = vmatpush.msra.mxu0 %v299
    %578 = vmatpush.msra.mxu0 %v297
    %579 = vmatpush.msra.mxu0 %v295
    %580 = vmatpush.msra.mxu0 %v293
    %581 = vmatpush.msra.mxu0 %v291
    %582 = vmatpush.msra.mxu0 %v289
    %583 = vmatpush.msra.mxu0 %v287
    %584 = vmatpush.msra.mxu0 %v285
    %585 = vmatpush.msra.mxu0 %v283
    %586 = vmatpush.msra.mxu0 %v281
    %587 = vmatmul.f32.gmra.mxu0 %v113
    %v588 = vpop.f32.mrf.mxu0
    %v589 = vadd.f32 %v566, %v588
    %590 = vmatmul.f32.gmra.mxu0 %v119
    %v591 = vpop.f32.mrf.mxu0
    %v592 = vadd.f32 %v569, %v591
    %593 = vdwg.mxu0
    %v594 = vmul.f32 %v451, 0.5
    %v595 = vmul.f32 %v589, 0.5
    %v596 = vmul.f32 %v454, 0.5
    %v597 = vmul.f32 %v592, 0.5
    %v598 = vmul.f32 %v451, 0.70710677
    %v599 = vmul.f32 %v589, 0.70710677
    %v600 = vmul.f32 %v454, 0.70710677
    %v601 = vmul.f32 %v592, 0.70710677
    %v602 = vmul.f32 %v598, %v598
    %v603 = vmin.f32 16.0, %v602
    %v604 = vmul.f32 %v603, 2.1237322e-06
    %v605 = vadd.f32 %v604, 0.00028619796
    %v606 = vmul.f32 %v603, %v605
    %v607 = vadd.f32 %v606, 0.0036580483
    %v608 = vmul.f32 %v603, %v607
    %v609 = vadd.f32 %v608, 0.05243302
    %v610 = vmul.f32 %v603, %v609
    %v611 = vadd.f32 %v610, 0.18741608
    %v612 = vmul.f32 %v603, %v611
    %v613 = vadd.f32 %v612, 1.1283791
    %v614 = vmul.f32 %v598, %v613
    %v615 = vmul.f32 %v603, 3.8918573e-05
    %v616 = vadd.f32 %v615, 0.001143296
    %v617 = vmul.f32 %v603, %v616
    %v618 = vadd.f32 %v617, 0.014752088
    %v619 = vmul.f32 %v603, %v618
    %v620 = vadd.f32 %v619, 0.112945676
    %v621 = vmul.f32 %v603, %v620
    %v622 = vadd.f32 %v621, 0.4994258
    %v623 = vmul.f32 %v603, %v622
    %v624 = vadd.f32 %v623, 1.0
    %v625 = vrcp.pop %v624
    %v626 = vmul.f32 %v624, %v625
    %v627 = vsub.f32 1.0, %v626
    %v628 = vmul.f32 %v625, %v627
    %v629 = vadd.f32 %v625, %v628
    %vm630 = vweird.f32 %v624
    %vm631 = vweird.f32 %v625
    %vm632 = vmor %vm630, %vm631
    %v633 = vsel %vm632, %v625, %v629
    %v634 = vand.u32 2147483647, %v624
    %vm635 = vcmp.eq.f32.partialorder %v634, 8.507059e+37
    %v636 = vand.u32 %v624, 2147483648
    %v637 = vor.u32 1.1754944e-38, %v636
    %v638 = vsel %vm635, %v637, %v633
    %v639 = vmul.f32 %v614, %v638
    %v640 = vmin.f32 %v639, 1.0
    %v641 = vmax.f32 %v640, -1.0
    %v642 = vmul.f32 %v599, %v599
    %v643 = vmin.f32 16.0, %v642
    %v644 = vmul.f32 %v643, 2.1237322e-06
    %v645 = vadd.f32 %v644, 0.00028619796
    %v646 = vmul.f32 %v643, %v645
    %v647 = vadd.f32 %v646, 0.0036580483
    %v648 = vmul.f32 %v643, %v647
    %v649 = vadd.f32 %v648, 0.05243302
    %v650 = vmul.f32 %v643, %v649
    %v651 = vadd.f32 %v650, 0.18741608
    %v652 = vmul.f32 %v643, %v651
    %v653 = vadd.f32 %v652, 1.1283791
    %v654 = vmul.f32 %v599, %v653
    %v655 = vmul.f32 %v643, 3.8918573e-05
    %v656 = vadd.f32 %v655, 0.001143296
    %v657 = vmul.f32 %v643, %v656
    %v658 = vadd.f32 %v657, 0.014752088
    %v659 = vmul.f32 %v643, %v658
    %v660 = vadd.f32 %v659, 0.112945676
    %v661 = vmul.f32 %v643, %v660
    %v662 = vadd.f32 %v661, 0.4994258
    %v663 = vmul.f32 %v643, %v662
    %v664 = vadd.f32 %v663, 1.0
    %v665 = vrcp.pop %v664
    %v666 = vmul.f32 %v664, %v665
    %v667 = vsub.f32 1.0, %v666
    %v668 = vmul.f32 %v665, %v667
    %v669 = vadd.f32 %v665, %v668
    %vm670 = vweird.f32 %v664
    %vm671 = vweird.f32 %v665
    %vm672 = vmor %vm670, %vm671
    %v673 = vsel %vm672, %v665, %v669
    %v674 = vand.u32 2147483647, %v664
    %vm675 = vcmp.eq.f32.partialorder %v674, 8.507059e+37
    %v676 = vand.u32 %v664, 2147483648
    %v677 = vor.u32 1.1754944e-38, %v676
    %v678 = vsel %vm675, %v677, %v673
    %v679 = vmul.f32 %v654, %v678
    %v680 = vmin.f32 %v679, 1.0
    %v681 = vmax.f32 %v680, -1.0
    %v682 = vmul.f32 %v600, %v600
    %v683 = vmin.f32 16.0, %v682
    %v684 = vmul.f32 %v683, 2.1237322e-06
    %v685 = vadd.f32 %v684, 0.00028619796
    %v686 = vmul.f32 %v683, %v685
    %v687 = vadd.f32 %v686, 0.0036580483
    %v688 = vmul.f32 %v683, %v687
    %v689 = vadd.f32 %v688, 0.05243302
    %v690 = vmul.f32 %v683, %v689
    %v691 = vadd.f32 %v690, 0.18741608
    %v692 = vmul.f32 %v683, %v691
    %v693 = vadd.f32 %v692, 1.1283791
    %v694 = vmul.f32 %v600, %v693
    %v695 = vmul.f32 %v683, 3.8918573e-05
    %v696 = vadd.f32 %v695, 0.001143296
    %v697 = vmul.f32 %v683, %v696
    %v698 = vadd.f32 %v697, 0.014752088
    %v699 = vmul.f32 %v683, %v698
    %v700 = vadd.f32 %v699, 0.112945676
    %v701 = vmul.f32 %v683, %v700
    %v702 = vadd.f32 %v701, 0.4994258
    %v703 = vmul.f32 %v683, %v702
    %v704 = vadd.f32 %v703, 1.0
    %v705 = vrcp.pop %v704
    %v706 = vmul.f32 %v704, %v705
    %v707 = vsub.f32 1.0, %v706
    %v708 = vmul.f32 %v705, %v707
    %v709 = vadd.f32 %v705, %v708
    %vm710 = vweird.f32 %v704
    %vm711 = vweird.f32 %v705
    %vm712 = vmor %vm710, %vm711
    %v713 = vsel %vm712, %v705, %v709
    %v714 = vand.u32 2147483647, %v704
    %vm715 = vcmp.eq.f32.partialorder %v714, 8.507059e+37
    %v716 = vand.u32 %v704, 2147483648
    %v717 = vor.u32 1.1754944e-38, %v716
    %v718 = vsel %vm715, %v717, %v713
    %v719 = vmul.f32 %v694, %v718
    %v720 = vmin.f32 %v719, 1.0
    %v721 = vmax.f32 %v720, -1.0
    %v722 = vmul.f32 %v601, %v601
    %v723 = vmin.f32 16.0, %v722
    %v724 = vmul.f32 %v723, 2.1237322e-06
    %v725 = vadd.f32 %v724, 0.00028619796
    %v726 = vmul.f32 %v723, %v725
    %v727 = vadd.f32 %v726, 0.0036580483
    %v728 = vmul.f32 %v723, %v727
    %v729 = vadd.f32 %v728, 0.05243302
    %v730 = vmul.f32 %v723, %v729
    %v731 = vadd.f32 %v730, 0.18741608
    %v732 = vmul.f32 %v723, %v731
    %v733 = vadd.f32 %v732, 1.1283791
    %v734 = vmul.f32 %v601, %v733
    %v735 = vmul.f32 %v723, 3.8918573e-05
    %v736 = vadd.f32 %v735, 0.001143296
    %v737 = vmul.f32 %v723, %v736
    %v738 = vadd.f32 %v737, 0.014752088
    %v739 = vmul.f32 %v723, %v738
    %v740 = vadd.f32 %v739, 0.112945676
    %v741 = vmul.f32 %v723, %v740
    %v742 = vadd.f32 %v741, 0.4994258
    %v743 = vmul.f32 %v723, %v742
    %v744 = vadd.f32 %v743, 1.0
    %v745 = vrcp.pop %v744
    %v746 = vmul.f32 %v744, %v745
    %v747 = vsub.f32 1.0, %v746
    %v748 = vmul.f32 %v745, %v747
    %v749 = vadd.f32 %v745, %v748
    %vm750 = vweird.f32 %v744
    %vm751 = vweird.f32 %v745
    %vm752 = vmor %vm750, %vm751
    %v753 = vsel %vm752, %v745, %v749
    %v754 = vand.u32 2147483647, %v744
    %vm755 = vcmp.eq.f32.partialorder %v754, 8.507059e+37
    %v756 = vand.u32 %v744, 2147483648
    %v757 = vor.u32 1.1754944e-38, %v756
    %v758 = vsel %vm755, %v757, %v753
    %v759 = vmul.f32 %v734, %v758
    %v760 = vmin.f32 %v759, 1.0
    %v761 = vmax.f32 %v760, -1.0
    %v762 = vadd.f32 %v641, 1.0
    %v763 = vadd.f32 %v681, 1.0
    %v764 = vadd.f32 %v721, 1.0
    %v765 = vadd.f32 %v761, 1.0
    %v766 = vmul.f32 %v594, %v762
    %v767 = vmul.f32 %v595, %v763
    %v768 = vmul.f32 %v596, %v764
    %v769 = vmul.f32 %v597, %v765
    %v770 = vld [vmem:[#allocation8] sm:$0xff]
    %v771 = vld [vmem:[#allocation8 + $0x8] sm:$0xff]
    %v772 = vld [vmem:[#allocation8 + $0x10] sm:$0xff]
    %v773 = vld [vmem:[#allocation8 + $0x18] sm:$0xff]
    %v774 = vld [vmem:[#allocation8 + $0x20] sm:$0xff]
    %v775 = vld [vmem:[#allocation8 + $0x28] sm:$0xff]
    %v776 = vld [vmem:[#allocation8 + $0x30] sm:$0xff]
    %v777 = vld [vmem:[#allocation8 + $0x38] sm:$0xff]
    %v778 = vld [vmem:[#allocation8 + $0x40] sm:$0xff]
    %v779 = vld [vmem:[#allocation8 + $0x48] sm:$0xff]
    %v780 = vld [vmem:[#allocation8 + $0x50] sm:$0xff]
    %v781 = vld [vmem:[#allocation8 + $0x58] sm:$0xff]
    %v782 = vld [vmem:[#allocation8 + $0x60] sm:$0xff]
    %v783 = vld [vmem:[#allocation8 + $0x68] sm:$0xff]
    %v784 = vld [vmem:[#allocation8 + $0x70] sm:$0xff]
    %v785 = vld [vmem:[#allocation8 + $0x78] sm:$0xff]
    %v786 = vld [vmem:[#allocation8 + $0x80] sm:$0xff]
    %v787 = vld [vmem:[#allocation8 + $0x88] sm:$0xff]
    %v788 = vld [vmem:[#allocation8 + $0x90] sm:$0xff]
    %v789 = vld [vmem:[#allocation8 + $0x98] sm:$0xff]
    %v790 = vld [vmem:[#allocation8 + $0xa0] sm:$0xff]
    %v791 = vld [vmem:[#allocation8 + $0xa8] sm:$0xff]
    %v792 = vld [vmem:[#allocation8 + $0xb0] sm:$0xff]
    %v793 = vld [vmem:[#allocation8 + $0xb8] sm:$0xff]
    %v794 = vld [vmem:[#allocation8 + $0xc0] sm:$0xff]
    %v795 = vld [vmem:[#allocation8 + $0xc8] sm:$0xff]
    %v796 = vld [vmem:[#allocation8 + $0xd0] sm:$0xff]
    %v797 = vld [vmem:[#allocation8 + $0xd8] sm:$0xff]
    %v798 = vld [vmem:[#allocation8 + $0xe0] sm:$0xff]
    %v799 = vld [vmem:[#allocation8 + $0xe8] sm:$0xff]
    %v800 = vld [vmem:[#allocation8 + $0xf0] sm:$0xff]
    %v801 = vld [vmem:[#allocation8 + $0xf8] sm:$0xff]
    %v802 = vld [vmem:[%s5] sm:$0x1]
    %v804 = vperm.slane %v802, 0
    %806 = vmatpush.msra.mxu0 %v785
    %807 = vmatpush.msra.mxu0 %v784
    %808 = vmatpush.msra.mxu0 %v783
    %809 = vmatpush.msra.mxu0 %v782
    %810 = vmatpush.msra.mxu0 %v781
    %811 = vmatpush.msra.mxu0 %v780
    %812 = vmatpush.msra.mxu0 %v779
    %813 = vmatpush.msra.mxu0 %v778
    %814 = vmatpush.msra.mxu0 %v777
    %815 = vmatpush.msra.mxu0 %v776
    %816 = vmatpush.msra.mxu0 %v775
    %817 = vmatpush.msra.mxu0 %v774
    %818 = vmatpush.msra.mxu0 %v773
    %819 = vmatpush.msra.mxu0 %v772
    %820 = vmatpush.msra.mxu0 %v771
    %821 = vmatpush.msra.mxu0 %v770
    %822 = vmatmul.f32.gmra.mxu0 %v766
    %v823 = vpop.f32.mrf.mxu0
    %v824 = vadd.f32 %v804, %v823
    %825 = vmatmul.f32.gmra.mxu0 %v768
    %v826 = vpop.f32.mrf.mxu0
    %v827 = vadd.f32 %v804, %v826
    %828 = vdwg.mxu0
    %829 = vmatpush.msra.mxu0 %v801
    %830 = vmatpush.msra.mxu0 %v800
    %831 = vmatpush.msra.mxu0 %v799
    %832 = vmatpush.msra.mxu0 %v798
    %833 = vmatpush.msra.mxu0 %v797
    %834 = vmatpush.msra.mxu0 %v796
    %835 = vmatpush.msra.mxu0 %v795
    %836 = vmatpush.msra.mxu0 %v794
    %837 = vmatpush.msra.mxu0 %v793
    %838 = vmatpush.msra.mxu0 %v792
    %839 = vmatpush.msra.mxu0 %v791
    %840 = vmatpush.msra.mxu0 %v790
    %841 = vmatpush.msra.mxu0 %v789
    %842 = vmatpush.msra.mxu0 %v788
    %843 = vmatpush.msra.mxu0 %v787
    %844 = vmatpush.msra.mxu0 %v786
    %845 = vmatmul.f32.gmra.mxu0 %v767
    %v846 = vpop.f32.mrf.mxu0
    %v847 = vadd.f32 %v824, %v846
    %848 = vmatmul.f32.gmra.mxu0 %v769
    %v849 = vpop.f32.mrf.mxu0
    %v850 = vadd.f32 %v827, %v849
    %851 = vdwg.mxu0
    %v852 = vmul.f32 %v847, 0.5
    %v853 = vmul.f32 %v850, 0.5
    %v854 = vmul.f32 %v847, 0.70710677
    %v855 = vmul.f32 %v850, 0.70710677
    %v856 = vmul.f32 %v854, %v854
    %v857 = vmin.f32 16.0, %v856
    %v858 = vmul.f32 %v857, 2.1237322e-06
    %v859 = vadd.f32 %v858, 0.00028619796
    %v860 = vmul.f32 %v857, %v859
    %v861 = vadd.f32 %v860, 0.0036580483
    %v862 = vmul.f32 %v857, %v861
    %v863 = vadd.f32 %v862, 0.05243302
    %v864 = vmul.f32 %v857, %v863
    %v865 = vadd.f32 %v864, 0.18741608
    %v866 = vmul.f32 %v857, %v865
    %v867 = vadd.f32 %v866, 1.1283791
    %v868 = vmul.f32 %v854, %v867
    %v869 = vmul.f32 %v857, 3.8918573e-05
    %v870 = vadd.f32 %v869, 0.001143296
    %v871 = vmul.f32 %v857, %v870
    %v872 = vadd.f32 %v871, 0.014752088
    %v873 = vmul.f32 %v857, %v872
    %v874 = vadd.f32 %v873, 0.112945676
    %v875 = vmul.f32 %v857, %v874
    %v876 = vadd.f32 %v875, 0.4994258
    %v877 = vmul.f32 %v857, %v876
    %v878 = vadd.f32 %v877, 1.0
    %v879 = vrcp.pop %v878
    %v880 = vmul.f32 %v878, %v879
    %v881 = vsub.f32 1.0, %v880
    %v882 = vmul.f32 %v879, %v881
    %v883 = vadd.f32 %v879, %v882
    %vm884 = vweird.f32 %v878
    %vm885 = vweird.f32 %v879
    %vm886 = vmor %vm884, %vm885
    %v887 = vsel %vm886, %v879, %v883
    %v888 = vand.u32 2147483647, %v878
    %vm889 = vcmp.eq.f32.partialorder %v888, 8.507059e+37
    %v890 = vand.u32 %v878, 2147483648
    %v891 = vor.u32 1.1754944e-38, %v890
    %v892 = vsel %vm889, %v891, %v887
    %v893 = vmul.f32 %v868, %v892
    %v894 = vmin.f32 %v893, 1.0
    %v895 = vmax.f32 %v894, -1.0
    %v896 = vmul.f32 %v855, %v855
    %v897 = vmin.f32 16.0, %v896
    %v898 = vmul.f32 %v897, 2.1237322e-06
    %v899 = vadd.f32 %v898, 0.00028619796
    %v900 = vmul.f32 %v897, %v899
    %v901 = vadd.f32 %v900, 0.0036580483
    %v902 = vmul.f32 %v897, %v901
    %v903 = vadd.f32 %v902, 0.05243302
    %v904 = vmul.f32 %v897, %v903
    %v905 = vadd.f32 %v904, 0.18741608
    %v906 = vmul.f32 %v897, %v905
    %v907 = vadd.f32 %v906, 1.1283791
    %v908 = vmul.f32 %v855, %v907
    %v909 = vmul.f32 %v897, 3.8918573e-05
    %v910 = vadd.f32 %v909, 0.001143296
    %v911 = vmul.f32 %v897, %v910
    %v912 = vadd.f32 %v911, 0.014752088
    %v913 = vmul.f32 %v897, %v912
    %v914 = vadd.f32 %v913, 0.112945676
    %v915 = vmul.f32 %v897, %v914
    %v916 = vadd.f32 %v915, 0.4994258
    %v917 = vmul.f32 %v897, %v916
    %v918 = vadd.f32 %v917, 1.0
    %v919 = vrcp.pop %v918
    %v920 = vmul.f32 %v918, %v919
    %v921 = vsub.f32 1.0, %v920
    %v922 = vmul.f32 %v919, %v921
    %v923 = vadd.f32 %v919, %v922
    %vm924 = vweird.f32 %v918
    %vm925 = vweird.f32 %v919
    %vm926 = vmor %vm924, %vm925
    %v927 = vsel %vm926, %v919, %v923
    %v928 = vand.u32 2147483647, %v918
    %vm929 = vcmp.eq.f32.partialorder %v928, 8.507059e+37
    %v930 = vand.u32 %v918, 2147483648
    %v931 = vor.u32 1.1754944e-38, %v930
    %v932 = vsel %vm929, %v931, %v927
    %v933 = vmul.f32 %v908, %v932
    %v934 = vmin.f32 %v933, 1.0
    %v935 = vmax.f32 %v934, -1.0
    %v936 = vadd.f32 %v895, 1.0
    %v937 = vadd.f32 %v935, 1.0
    %v938 = vmul.f32 %v852, %v936
    %v939 = vmul.f32 %v853, %v937
    %v940 = vld [vmem:[#allocation5] sm:$0xff]
    %v941 = vld [vmem:[#allocation5 + $0x8] sm:$0xff]
    %v942 = vld [vmem:[#allocation10] sm:$0xff]
    %v943 = vld [vmem:[#allocation10 + $0x8] sm:$0xff]
    %v944 = vld [vmem:[#allocation10 + $0x10] sm:$0xff]
    %v945 = vld [vmem:[#allocation10 + $0x18] sm:$0xff]
    %v946 = vld [vmem:[#allocation10 + $0x20] sm:$0xff]
    %v947 = vld [vmem:[#allocation10 + $0x28] sm:$0xff]
    %v948 = vld [vmem:[#allocation10 + $0x30] sm:$0xff]
    %v949 = vld [vmem:[#allocation10 + $0x38] sm:$0xff]
    %v950 = vld [vmem:[#allocation10 + $0x40] sm:$0xff]
    %v951 = vld [vmem:[#allocation10 + $0x48] sm:$0xff]
    %v952 = vld [vmem:[#allocation10 + $0x50] sm:$0xff]
    %v953 = vld [vmem:[#allocation10 + $0x58] sm:$0xff]
    %v954 = vld [vmem:[#allocation10 + $0x60] sm:$0xff]
    %v955 = vld [vmem:[#allocation10 + $0x68] sm:$0xff]
    %v956 = vld [vmem:[#allocation10 + $0x70] sm:$0xff]
    %v957 = vld [vmem:[#allocation10 + $0x78] sm:$0xff]
    %v958 = vld [vmem:[#allocation10 + $0x80] sm:$0xff]
    %v959 = vld [vmem:[#allocation10 + $0x88] sm:$0xff]
    %v960 = vld [vmem:[#allocation10 + $0x90] sm:$0xff]
    %v961 = vld [vmem:[#allocation10 + $0x98] sm:$0xff]
    %v962 = vld [vmem:[#allocation10 + $0xa0] sm:$0xff]
    %v963 = vld [vmem:[#allocation10 + $0xa8] sm:$0xff]
    %v964 = vld [vmem:[#allocation10 + $0xb0] sm:$0xff]
    %v965 = vld [vmem:[#allocation10 + $0xb8] sm:$0xff]
    %v966 = vld [vmem:[#allocation10 + $0xc0] sm:$0xff]
    %v967 = vld [vmem:[#allocation10 + $0xc8] sm:$0xff]
    %v968 = vld [vmem:[#allocation10 + $0xd0] sm:$0xff]
    %v969 = vld [vmem:[#allocation10 + $0xd8] sm:$0xff]
    %v970 = vld [vmem:[#allocation10 + $0xe0] sm:$0xff]
    %v971 = vld [vmem:[#allocation10 + $0xe8] sm:$0xff]
    %v972 = vld [vmem:[#allocation10 + $0xf0] sm:$0xff]
    %v973 = vld [vmem:[#allocation10 + $0xf8] sm:$0xff]
    %v974 = vld [vmem:[%s7] sm:$0x1]
    %v976 = vperm.slane %v974, 0
    %978 = vmatpush.msra.mxu0 %v957
    %979 = vmatpush.msra.mxu0 %v956
    %980 = vmatpush.msra.mxu0 %v955
    %981 = vmatpush.msra.mxu0 %v954
    %982 = vmatpush.msra.mxu0 %v953
    %983 = vmatpush.msra.mxu0 %v952
    %984 = vmatpush.msra.mxu0 %v951
    %985 = vmatpush.msra.mxu0 %v950
    %986 = vmatpush.msra.mxu0 %v949
    %987 = vmatpush.msra.mxu0 %v948
    %988 = vmatpush.msra.mxu0 %v947
    %989 = vmatpush.msra.mxu0 %v946
    %990 = vmatpush.msra.mxu0 %v945
    %991 = vmatpush.msra.mxu0 %v944
    %992 = vmatpush.msra.mxu0 %v943
    %993 = vmatpush.msra.mxu0 %v942
    %994 = vmatmul.f32.gmra.mxu0 %v938
    %v995 = vpop.f32.mrf.mxu0
    %v996 = vadd.f32 %v976, %v995
    %997 = vmatmul.f32.gmra.mxu0 %v939
    %v998 = vpop.f32.mrf.mxu0
    %v999 = vadd.f32 %v976, %v998
    %1000 = vdwg.mxu0
    %1001 = vmatpush.msra.mxu0 %v973
    %1002 = vmatpush.msra.mxu0 %v972
    %1003 = vmatpush.msra.mxu0 %v971
    %1004 = vmatpush.msra.mxu0 %v970
    %1005 = vmatpush.msra.mxu0 %v969
    %1006 = vmatpush.msra.mxu0 %v968
    %1007 = vmatpush.msra.mxu0 %v967
    %1008 = vmatpush.msra.mxu0 %v966
    %1009 = vmatpush.msra.mxu0 %v965
    %1010 = vmatpush.msra.mxu0 %v964
    %1011 = vmatpush.msra.mxu0 %v963
    %1012 = vmatpush.msra.mxu0 %v962
    %1013 = vmatpush.msra.mxu0 %v961
    %1014 = vmatpush.msra.mxu0 %v960
    %1015 = vmatpush.msra.mxu0 %v959
    %1016 = vmatpush.msra.mxu0 %v958
    %1017 = vmatmul.f32.gmra.mxu0 %v940
    %v1018 = vpop.f32.mrf.mxu0
    %v1019 = vadd.f32 %v996, %v1018
    %1020 = vmatmul.f32.gmra.mxu0 %v941
    %v1021 = vpop.f32.mrf.mxu0
    %v1022 = vadd.f32 %v999, %v1021
    %1023 = vdwg.mxu0
    %1024 = vst [vmem:[#allocation11] sm:$0xff] %v1019
    %1025 = vst [vmem:[#allocation11 + $0x8] sm:$0xff] %v1022
    // Predicated region
    $region54: #{tpu_custom_call.1} parent=1 // pred_check
      _
    $region55: #{tpu_custom_call.1} parent=1 // pred_check_branch
      %1027 = sbr.rel (0) target = $region57
    $region56: #{tpu_custom_call.1} parent=1 // pred_region
      %1029 = vsyncadd [#allocation4], 0
      %s1030 = sshll.u32 [#allocation11], 4
      %s1031 = int_to_ptr.vmem [resolvable:$true] %s1030
      %s1032 = sshll.u32 %s8, 4
      %s1033 = int_to_ptr.hbm [resolvable:$true] %s1032
      %1038 = dma.vmem_to_hbm [thread:$0]  %s1031, 256, %s1033, [#allocation4], 128, 128, 8
    $region57: #{tpu_custom_call.1} parent=1 // pred_fallthru
      _
    // Predicated region
    $region58: #{tpu_custom_call.1} parent=1 // pred_check
      _
    $region59: #{tpu_custom_call.1} parent=1 // pred_check_branch
      %1040 = sbr.rel (0) target = $region61
    $region60: #{tpu_custom_call.1} parent=1 // pred_region
      %1042 = dma.done [#allocation4], 256
    $region61: #{tpu_custom_call.1} parent=1 // pred_fallthru
      _
    %1043 = vsyncpa [#allocation3], 1
    %1044 = vsyncpa [#allocation6], 1
    %1045 = vsyncpa [#allocation9], 1
    %1046 = vsyncpa [#allocation4], 1

</llo_original>
